<compile_context>
chip_gen: v7x
topology: tpu7x:2x2x1
jax: 0.10.0
libtpu: 0.0.40
codegen_flags: <defaults>
</compile_context>

<pallas_src>
import functools

import jax
import jax.numpy as jnp
import numpy as np
from jax.experimental import pallas as pl
from jax.experimental.pallas import tpu as pltpu

LANE = 128                # lanes per sublane row
MAX_BLOCK_ROWS = 512      # sublane rows per grid step (512*128 = 65536 boxes)


def _fold(x):
    """(R, 128) -> (8, 128) partial sums with plain VPU adds (no XLU reduce)."""
    r = x.shape[0]
    return jnp.sum(x.reshape(r // 8, 8, LANE), axis=0)


def _iou_losses(pred_ref, tgt_ref, smooth):
    """Dense (R, 128) per-box IoU loss from component-planar (4, R, 128) refs."""
    f32 = jnp.float32
    pl_ = pred_ref[0].astype(f32)
    pt_ = pred_ref[1].astype(f32)
    pr_ = pred_ref[2].astype(f32)
    pb_ = pred_ref[3].astype(f32)
    tl_ = tgt_ref[0].astype(f32)
    tt_ = tgt_ref[1].astype(f32)
    tr_ = tgt_ref[2].astype(f32)
    tb_ = tgt_ref[3].astype(f32)

    target_area = (tl_ + tr_) * (tt_ + tb_)
    pred_area = (pl_ + pr_) * (pt_ + pb_)
    w_intersect = jnp.minimum(pl_, tl_) + jnp.minimum(pr_, tr_)
    h_intersect = jnp.minimum(pb_, tb_) + jnp.minimum(pt_, tt_)
    area_intersect = w_intersect * h_intersect
    area_union = target_area + pred_area - area_intersect
    iou = (area_intersect + smooth) / (area_union + smooth)
    return 1.0 - iou  # (R, 128) f32


def _box_loss_kernel_weighted(pred_ref, tgt_ref, w_ref, out_ref, *, smooth):
    losses = _iou_losses(pred_ref, tgt_ref, smooth)        # (R, 128)
    w = w_ref[...].astype(jnp.float32)                     # (R, 128)
    out_ref[0, 0] = _fold(losses * w)   # partial sum(loss * weight)
    out_ref[0, 1] = _fold(w)            # partial sum(weight)
    out_ref[0, 2] = _fold(losses)       # partial sum(loss)


def _box_loss_kernel_unweighted(pred_ref, tgt_ref, out_ref, *, smooth):
    losses = _iou_losses(pred_ref, tgt_ref, smooth)        # (R, 128)
    out_ref[0] = _fold(losses)          # partial sum(loss)


def _planarize(x, n, rows_pad, pad_value):
    """(..., 4) boxes -> (4, rows_pad, 128) component-planar, padded."""
    x2 = jnp.transpose(x.reshape(n, 4))            # (4, n)
    pad = rows_pad * LANE - n
    if pad:
        x2 = jnp.pad(x2, ((0, 0), (0, pad)), constant_values=pad_value)
    return x2.reshape(4, rows_pad, LANE)


def box_loss(pred, target, weight=None, smooth: float = 1.0,
             max_block_rows: int = MAX_BLOCK_ROWS):
    """Pallas implementation of BoxLoss.forward.

    pred, target: (..., 4) arrays of box distances (l, t, r, b).
    weight:       optional (...,) array.
    Returns a scalar float32 loss.
    """
    assert pred.shape == target.shape and pred.shape[-1] == 4
    lead = pred.shape[:-1]
    n = int(np.prod(lead)) if lead else 1
    assert n >= 1

    rows = -(-n // LANE)                                   # ceil(n / 128)
    block_rows = min(int(max_block_rows), ((rows + 7) // 8) * 8)
    rows_pad = -(-rows // block_rows) * block_rows
    grid = (rows_pad // block_rows,)

    # Pad boxes with 1.0: padded lanes give IoU == 1 -> loss == 0 for any
    # smooth >= 0 (no NaN even when smooth == 0), so no mask stream is needed.
    p3 = _planarize(pred, n, rows_pad, 1.0)
    t3 = _planarize(target, n, rows_pad, 1.0)

    box_spec = pl.BlockSpec((4, block_rows, LANE), lambda i: (0, i, 0))
    params = pltpu.CompilerParams(dimension_semantics=("parallel",))

    if weight is None:
        kernel = functools.partial(_box_loss_kernel_unweighted,
                                   smooth=float(smooth))
        partials = pl.pallas_call(
            kernel,
            out_shape=jax.ShapeDtypeStruct((grid[0], 8, LANE), jnp.float32),
            grid_spec=pltpu.PrefetchScalarGridSpec(
                num_scalar_prefetch=0,
                grid=grid,
                in_specs=[box_spec, box_spec],
                out_specs=pl.BlockSpec((1, 8, LANE), lambda i: (i, 0, 0)),
            ),
            compiler_params=params,
        )(p3, t3)
        return jnp.sum(partials) / float(n)

    assert weight.shape == lead
    w1 = weight.reshape(n)
    pad = rows_pad * LANE - n
    if pad:
        w1 = jnp.pad(w1, (0, pad))                         # zero-pad weights
    w3 = w1.reshape(rows_pad, LANE)

    kernel = functools.partial(_box_loss_kernel_weighted, smooth=float(smooth))
    partials = pl.pallas_call(
        kernel,
        out_shape=jax.ShapeDtypeStruct((grid[0], 3, 8, LANE), jnp.float32),
        grid_spec=pltpu.PrefetchScalarGridSpec(
            num_scalar_prefetch=0,
            grid=grid,
            in_specs=[
                box_spec,
                box_spec,
                pl.BlockSpec((block_rows, LANE), lambda i: (i, 0)),
            ],
            out_specs=pl.BlockSpec((1, 3, 8, LANE), lambda i: (i, 0, 0, 0)),
        ),
        compiler_params=params,
    )(p3, t3, w3)

    sums = jnp.sum(partials, axis=(0, 2, 3))               # (3,)
    sum_lw, sum_w, sum_l = sums[0], sums[1], sums[2]
    mean_loss = sum_l / float(n)
    weighted = sum_lw / jnp.where(sum_w > 0, sum_w, 1.0)
    return jnp.where(sum_w > 0, weighted, mean_loss)


def _ref_box_loss(pred, target, weight=None, smooth: float = 1.0):
    """Pure-JAX reference matching the PyTorch module (jit-safe)."""
    ta = (target[..., 0] + target[..., 2]) * (target[..., 1] + target[..., 3])
    pa = (pred[..., 0] + pred[..., 2]) * (pred[..., 1] + pred[..., 3])
    wi = (jnp.minimum(pred[..., 0], target[..., 0])
          + jnp.minimum(pred[..., 2], target[..., 2]))
    hi = (jnp.minimum(pred[..., 3], target[..., 3])
          + jnp.minimum(pred[..., 1], target[..., 1]))
    ai = wi * hi
    au = ta + pa - ai
    losses = 1.0 - (ai + smooth) / (au + smooth)
    if weight is None:
        return jnp.mean(losses)
    wsum = jnp.sum(weight)
    weighted = jnp.sum(losses * weight) / jnp.where(wsum > 0, wsum, 1.0)
    return jnp.where(wsum > 0, weighted, jnp.mean(losses))


if __name__ == "__main__":
    key = jax.random.PRNGKey(0)
    k1, k2, k3 = jax.random.split(key, 3)

    # Small shapes consistent with the module: (batch, num_boxes, 4)
    batch, num_boxes = 2, 8
    pred = jax.random.uniform(k1, (batch, num_boxes, 4), jnp.float32, 0.1, 5.0)
    target = jax.random.uniform(k2, (batch, num_boxes, 4), jnp.float32, 0.1, 5.0)
    weight = jax.random.uniform(k3, (batch, num_boxes), jnp.float32, 0.0, 1.0)

    # weighted branch
    out_w = jax.block_until_ready(box_loss(pred, target, weight))
    ref_w = _ref_box_loss(pred, target, weight)
    np.testing.assert_allclose(np.asarray(out_w), np.asarray(ref_w),
                               rtol=1e-5, atol=1e-6)

    # unweighted (mean) branch
    out_m = jax.block_until_ready(box_loss(pred, target, None))
    ref_m = _ref_box_loss(pred, target, None)
    np.testing.assert_allclose(np.asarray(out_m), np.asarray(ref_m),
                               rtol=1e-5, atol=1e-6)

    # smooth == 0 (padding must not introduce NaN)
    out_s0 = jax.block_until_ready(box_loss(pred, target, weight, smooth=0.0))
    ref_s0 = _ref_box_loss(pred, target, weight, smooth=0.0)
    np.testing.assert_allclose(np.asarray(out_s0), np.asarray(ref_s0),
                               rtol=1e-5, atol=1e-6)

    # non-multiple-of-128 box count (padding path inside one block)
    k4, k5, k6 = jax.random.split(jax.random.PRNGKey(1), 3)
    pred2 = jax.random.uniform(k4, (2, 300, 4), jnp.float32, 0.1, 5.0)
    target2 = jax.random.uniform(k5, (2, 300, 4), jnp.float32, 0.1, 5.0)
    weight2 = jax.random.uniform(k6, (2, 300), jnp.float32, 0.0, 1.0)
    out2 = jax.block_until_ready(box_loss(pred2, target2, weight2))
    ref2 = _ref_box_loss(pred2, target2, weight2)
    np.testing.assert_allclose(np.asarray(out2), np.asarray(ref2),
                               rtol=1e-5, atol=1e-6)

    # multi-step grid path (force small blocks so grid > 1)
    out3 = jax.block_until_ready(
        box_loss(pred2, target2, weight2, max_block_rows=8))
    np.testing.assert_allclose(np.asarray(out3), np.asarray(ref2),
                               rtol=1e-5, atol=1e-6)
    out4 = jax.block_until_ready(box_loss(pred2, target2, None,
                                          max_block_rows=8))
    ref4 = _ref_box_loss(pred2, target2, None)
    np.testing.assert_allclose(np.asarray(out4), np.asarray(ref4),
                               rtol=1e-5, atol=1e-6)

    print("KERNEL_OK")
</pallas_src>

<mosaic_0001>
module attributes {stable_mosaic.version = 11 : i64} {
  func.func @_box_loss_kernel_weighted(%arg0: i32, %arg1: memref<4x8x128xf32, #tpu.memory_space<vmem>>, %arg2: memref<4x8x128xf32, #tpu.memory_space<vmem>>, %arg3: memref<8x128xf32, #tpu.memory_space<vmem>>, %arg4: memref<1x3x8x128xf32, #tpu.memory_space<vmem>>) attributes {dimension_semantics = [#tpu.dimension_semantics<parallel>], iteration_bounds = array<i64: 1>, scalar_prefetch = 0 : i64, scratch_operands = 0 : i64, tpu.core_type = #tpu.core_type<tc>, window_params = [{transform_indices = @transform_0, window_bounds = array<i64: 4, 8, 128>}, {transform_indices = @transform_1, window_bounds = array<i64: 4, 8, 128>}, {transform_indices = @transform_2, window_bounds = array<i64: 8, 128>}, {transform_indices = @transform_3, window_bounds = array<i64: 1, 3, 8, 128>}]} {
    %c0 = arith.constant 0 : index
    %c0_0 = arith.constant 0 : index
    %c0_1 = arith.constant 0 : index
    %0 = vector.load %arg1[%c0, %c0_0, %c0_1] : memref<4x8x128xf32, #tpu.memory_space<vmem>>, vector<1x8x128xf32>
    %1 = vector.shape_cast %0 : vector<1x8x128xf32> to vector<8x128xf32>
    %c1 = arith.constant 1 : index
    %c0_2 = arith.constant 0 : index
    %c0_3 = arith.constant 0 : index
    %2 = vector.load %arg1[%c1, %c0_2, %c0_3] : memref<4x8x128xf32, #tpu.memory_space<vmem>>, vector<1x8x128xf32>
    %3 = vector.shape_cast %2 : vector<1x8x128xf32> to vector<8x128xf32>
    %c2 = arith.constant 2 : index
    %c0_4 = arith.constant 0 : index
    %c0_5 = arith.constant 0 : index
    %4 = vector.load %arg1[%c2, %c0_4, %c0_5] : memref<4x8x128xf32, #tpu.memory_space<vmem>>, vector<1x8x128xf32>
    %5 = vector.shape_cast %4 : vector<1x8x128xf32> to vector<8x128xf32>
    %c3 = arith.constant 3 : index
    %c0_6 = arith.constant 0 : index
    %c0_7 = arith.constant 0 : index
    %6 = vector.load %arg1[%c3, %c0_6, %c0_7] : memref<4x8x128xf32, #tpu.memory_space<vmem>>, vector<1x8x128xf32>
    %7 = vector.shape_cast %6 : vector<1x8x128xf32> to vector<8x128xf32>
    %c0_8 = arith.constant 0 : index
    %c0_9 = arith.constant 0 : index
    %c0_10 = arith.constant 0 : index
    %8 = vector.load %arg2[%c0_8, %c0_9, %c0_10] : memref<4x8x128xf32, #tpu.memory_space<vmem>>, vector<1x8x128xf32>
    %9 = vector.shape_cast %8 : vector<1x8x128xf32> to vector<8x128xf32>
    %c1_11 = arith.constant 1 : index
    %c0_12 = arith.constant 0 : index
    %c0_13 = arith.constant 0 : index
    %10 = vector.load %arg2[%c1_11, %c0_12, %c0_13] : memref<4x8x128xf32, #tpu.memory_space<vmem>>, vector<1x8x128xf32>
    %11 = vector.shape_cast %10 : vector<1x8x128xf32> to vector<8x128xf32>
    %c2_14 = arith.constant 2 : index
    %c0_15 = arith.constant 0 : index
    %c0_16 = arith.constant 0 : index
    %12 = vector.load %arg2[%c2_14, %c0_15, %c0_16] : memref<4x8x128xf32, #tpu.memory_space<vmem>>, vector<1x8x128xf32>
    %13 = vector.shape_cast %12 : vector<1x8x128xf32> to vector<8x128xf32>
    %c3_17 = arith.constant 3 : index
    %c0_18 = arith.constant 0 : index
    %c0_19 = arith.constant 0 : index
    %14 = vector.load %arg2[%c3_17, %c0_18, %c0_19] : memref<4x8x128xf32, #tpu.memory_space<vmem>>, vector<1x8x128xf32>
    %15 = vector.shape_cast %14 : vector<1x8x128xf32> to vector<8x128xf32>
    %16 = arith.addf %9, %13 : vector<8x128xf32>
    %17 = arith.addf %11, %15 : vector<8x128xf32>
    %18 = arith.mulf %16, %17 : vector<8x128xf32>
    %19 = arith.addf %1, %5 : vector<8x128xf32>
    %20 = arith.addf %3, %7 : vector<8x128xf32>
    %21 = arith.mulf %19, %20 : vector<8x128xf32>
    %22 = arith.minimumf %1, %9 : vector<8x128xf32>
    %23 = arith.minimumf %5, %13 : vector<8x128xf32>
    %24 = arith.addf %22, %23 : vector<8x128xf32>
    %25 = arith.minimumf %7, %15 : vector<8x128xf32>
    %26 = arith.minimumf %3, %11 : vector<8x128xf32>
    %27 = arith.addf %25, %26 : vector<8x128xf32>
    %28 = arith.mulf %24, %27 : vector<8x128xf32>
    %29 = arith.addf %18, %21 : vector<8x128xf32>
    %30 = arith.subf %29, %28 : vector<8x128xf32>
    %cst = arith.constant 1.000000e+00 : f32
    %31 = vector.broadcast %cst : f32 to vector<8x128xf32>
    %32 = arith.addf %28, %31 : vector<8x128xf32>
    %cst_20 = arith.constant 1.000000e+00 : f32
    %33 = vector.broadcast %cst_20 : f32 to vector<8x128xf32>
    %34 = arith.addf %30, %33 : vector<8x128xf32>
    %35 = arith.divf %32, %34 : vector<8x128xf32>
    %cst_21 = arith.constant 1.000000e+00 : f32
    %36 = vector.broadcast %cst_21 : f32 to vector<8x128xf32>
    %37 = arith.subf %36, %35 : vector<8x128xf32>
    %c0_22 = arith.constant 0 : index
    %c0_23 = arith.constant 0 : index
    %38 = vector.load %arg3[%c0_22, %c0_23] : memref<8x128xf32, #tpu.memory_space<vmem>>, vector<8x128xf32>
    %39 = arith.mulf %37, %38 : vector<8x128xf32>
    %40 = vector.shape_cast %39 : vector<8x128xf32> to vector<1x8x128xf32>
    %cst_24 = arith.constant dense<0.000000e+00> : vector<8x128xf32>
    %41 = vector.multi_reduction <add>, %40, %cst_24 [0] : vector<1x8x128xf32> to vector<8x128xf32>
    %c0_25 = arith.constant 0 : index
    %c0_26 = arith.constant 0 : index
    %c0_27 = arith.constant 0 : index
    %c0_28 = arith.constant 0 : index
    %42 = vector.load %arg4[%c0_25, %c0_26, %c0_27, %c0_28] : memref<1x3x8x128xf32, #tpu.memory_space<vmem>>, vector<1x1x8x128xf32>
    %43 = vector.shape_cast %42 : vector<1x1x8x128xf32> to vector<8x128xf32>
    %44 = vector.shape_cast %41 : vector<8x128xf32> to vector<1x1x8x128xf32>
    tpu.vector_store %arg4[%c0_25, %c0_26, %c0_27, %c0_28], %44 {strides = array<i32>} : memref<1x3x8x128xf32, #tpu.memory_space<vmem>>, vector<1x1x8x128xf32>,
    %45 = vector.shape_cast %38 : vector<8x128xf32> to vector<1x8x128xf32>
    %cst_29 = arith.constant dense<0.000000e+00> : vector<8x128xf32>
    %46 = vector.multi_reduction <add>, %45, %cst_29 [0] : vector<1x8x128xf32> to vector<8x128xf32>
    %c0_30 = arith.constant 0 : index
    %c1_31 = arith.constant 1 : index
    %c0_32 = arith.constant 0 : index
    %c0_33 = arith.constant 0 : index
    %47 = vector.load %arg4[%c0_30, %c1_31, %c0_32, %c0_33] : memref<1x3x8x128xf32, #tpu.memory_space<vmem>>, vector<1x1x8x128xf32>
    %48 = vector.shape_cast %47 : vector<1x1x8x128xf32> to vector<8x128xf32>
    %49 = vector.shape_cast %46 : vector<8x128xf32> to vector<1x1x8x128xf32>
    tpu.vector_store %arg4[%c0_30, %c1_31, %c0_32, %c0_33], %49 {strides = array<i32>} : memref<1x3x8x128xf32, #tpu.memory_space<vmem>>, vector<1x1x8x128xf32>,
    %50 = vector.shape_cast %37 : vector<8x128xf32> to vector<1x8x128xf32>
    %cst_34 = arith.constant dense<0.000000e+00> : vector<8x128xf32>
    %51 = vector.multi_reduction <add>, %50, %cst_34 [0] : vector<1x8x128xf32> to vector<8x128xf32>
    %c0_35 = arith.constant 0 : index
    %c2_36 = arith.constant 2 : index
    %c0_37 = arith.constant 0 : index
    %c0_38 = arith.constant 0 : index
    %52 = vector.load %arg4[%c0_35, %c2_36, %c0_37, %c0_38] : memref<1x3x8x128xf32, #tpu.memory_space<vmem>>, vector<1x1x8x128xf32>
    %53 = vector.shape_cast %52 : vector<1x1x8x128xf32> to vector<8x128xf32>
    %54 = vector.shape_cast %51 : vector<8x128xf32> to vector<1x1x8x128xf32>
    tpu.vector_store %arg4[%c0_35, %c2_36, %c0_37, %c0_38], %54 {strides = array<i32>} : memref<1x3x8x128xf32, #tpu.memory_space<vmem>>, vector<1x1x8x128xf32>,
    return
  }
  func.func @transform_0(%arg0: i32) -> (i32, i32, i32) {
    %c0_i32 = arith.constant 0 : i32
    %c0_i32_0 = arith.constant 0 : i32
    %c0_i32_1 = arith.constant 0 : i32
    return %c0_i32, %arg0, %c0_i32_0 : i32, i32, i32
  }
  func.func @transform_1(%arg0: i32) -> (i32, i32, i32) {
    %c0_i32 = arith.constant 0 : i32
    %c0_i32_0 = arith.constant 0 : i32
    %c0_i32_1 = arith.constant 0 : i32
    return %c0_i32, %arg0, %c0_i32_0 : i32, i32, i32
  }
  func.func @transform_2(%arg0: i32) -> (i32, i32) {
    %c0_i32 = arith.constant 0 : i32
    %c0_i32_0 = arith.constant 0 : i32
    return %arg0, %c0_i32 : i32, i32
  }
  func.func @transform_3(%arg0: i32) -> (i32, i32, i32, i32) {
    %c0_i32 = arith.constant 0 : i32
    %c0_i32_0 = arith.constant 0 : i32
    %c0_i32_1 = arith.constant 0 : i32
    %c0_i32_2 = arith.constant 0 : i32
    return %arg0, %c0_i32, %c0_i32_0, %c0_i32_1 : i32, i32, i32, i32
  }
}

</mosaic_0001>

<llo_original>
// kernel: tpu_custom_call.1
$region0: #{tpu_custom_call.1}
  #allocation0 [shape = 'u32[]', space=smem, size = 0x4, offset = 0x4, fixed_abs, tag = 'smem constant byte address 0x4 - core index']
  #allocation1 [shape = 'u32[144,128]{1,0:T(1,128)}', space=vmem, size = 0x12000, scoped, tag = 'internal scratch']
  %s0 = inlined_call_operand.hbm [shape: f32[4,8,128], index: 0, kind: input, shape index: {}]
  %s1 = inlined_call_operand.hbm [shape: f32[4,8,128], index: 1, kind: input, shape index: {}]
  %s2 = inlined_call_operand.hbm [shape: f32[8,128], index: 2, kind: input, shape index: {}]
  %s3 = inlined_call_operand.hbm [shape: f32[1,3,8,128], index: 3, kind: output, shape index: {}]
  %s4 = sld [smem:[#allocation0]]
  $region34: #{tpu_custom_call.1} parent=0
    _
  %s6 = ssub.s32 1, %s4
  %s7 = scalar_select 0, %s6, %s4
  $region1: #{tpu_custom_call.1} parent=0
    #allocation2 [shape = 'u8[16384]{0}', space=vmem, size = 0x4000, scoped, tag = 'input window, operand 0, single buffered']
    #allocation3 [shape = 's32[1]{0}', space=sflag, size = 0x4, scoped, tag = 'scoped memory for tpu_custom_call.1']
    #allocation4 [shape = 's32[1]{0}', space=sflag, size = 0x4, scoped, tag = 'scoped memory for tpu_custom_call.1']
    #allocation5 [shape = 'u8[16384]{0}', space=vmem, size = 0x4000, scoped, tag = 'input window, operand 1, single buffered']
    #allocation6 [shape = 's32[1]{0}', space=sflag, size = 0x4, scoped, tag = 'scoped memory for tpu_custom_call.1']
    #allocation7 [shape = 'u8[4096]{0}', space=vmem, size = 0x1000, scoped, tag = 'input window, operand 2, single buffered']
    #allocation8 [shape = 'u8[12288]{0}', space=vmem, size = 0x3000, scoped, tag = 'output window, operand 0, single buffered']
    %8 = vsyncpa [#allocation3], 0
    %9 = vsyncpa [#allocation6], 0
    %10 = vsyncpa [#allocation4], 0
    // Predicated region
    $region2: #{tpu_custom_call.1} parent=1 // pred_check
      _
    $region3: #{tpu_custom_call.1} parent=1 // pred_check_branch
      %12 = sbr.rel (0) target = $region5
    $region4: #{tpu_custom_call.1} parent=1 // pred_region
      %s14 = ssub.s32 512, 512
      %15 = vsyncadd [#allocation3], %s14
      %s16 = sshll.u32 [#allocation2], 4
      %s17 = int_to_ptr.vmem [resolvable:$true] %s16
      %22 = dma.hbm_to_vmem [thread:$0]  %s0, 512, %s17, [#allocation3], 128, 128, 8
    $region5: #{tpu_custom_call.1} parent=1 // pred_fallthru
      _
    // Predicated region
    $region6: #{tpu_custom_call.1} parent=1 // pred_check
      _
    $region7: #{tpu_custom_call.1} parent=1 // pred_check_branch
      %24 = sbr.rel (0) target = $region9
    $region8: #{tpu_custom_call.1} parent=1 // pred_region
      %s26 = ssub.s32 512, 512
      %27 = vsyncadd [#allocation6], %s26
      %s28 = sshll.u32 [#allocation5], 4
      %s29 = int_to_ptr.vmem [resolvable:$true] %s28
      %34 = dma.hbm_to_vmem [thread:$0]  %s1, 512, %s29, [#allocation6], 128, 128, 8
    $region9: #{tpu_custom_call.1} parent=1 // pred_fallthru
      _
    // Predicated region
    $region10: #{tpu_custom_call.1} parent=1 // pred_check
      _
    $region11: #{tpu_custom_call.1} parent=1 // pred_check_branch
      %36 = sbr.rel (0) target = $region13
    $region12: #{tpu_custom_call.1} parent=1 // pred_region
      %s38 = ssub.s32 128, 128
      %39 = vsyncadd [#allocation6], %s38
      %s41 = sshll.u32 [#allocation7], 4
      %s42 = int_to_ptr.vmem [resolvable:$true] %s41
      %44 = dma.hbm_to_vmem [thread:$0]  %s2, 128, %s42, [#allocation6]
    $region13: #{tpu_custom_call.1} parent=1 // pred_fallthru
      _
    // Predicated region
    $region14: #{tpu_custom_call.1} parent=1 // pred_check
      _
    $region15: #{tpu_custom_call.1} parent=1 // pred_check_branch
      %46 = sbr.rel (0) target = $region17
    $region16: #{tpu_custom_call.1} parent=1 // pred_region
      %47 = dma.done [#allocation3], 512
    $region17: #{tpu_custom_call.1} parent=1 // pred_fallthru
      _
    // Predicated region
    $region18: #{tpu_custom_call.1} parent=1 // pred_check
      _
    $region19: #{tpu_custom_call.1} parent=1 // pred_check_branch
      %49 = sbr.rel (0) target = $region21
    $region20: #{tpu_custom_call.1} parent=1 // pred_region
      %50 = dma.done [#allocation6], 512
    $region21: #{tpu_custom_call.1} parent=1 // pred_fallthru
      _
    // Predicated region
    $region22: #{tpu_custom_call.1} parent=1 // pred_check
      _
    $region23: #{tpu_custom_call.1} parent=1 // pred_check_branch
      %52 = sbr.rel (0) target = $region25
    $region24: #{tpu_custom_call.1} parent=1 // pred_region
      %53 = dma.done [#allocation6], 128
    $region25: #{tpu_custom_call.1} parent=1 // pred_fallthru
      _
    %v54 = vld [vmem:[#allocation2] sm:$0xff]
    %s55 = scalar_lea.vmem [#allocation2], 8
    %v56 = vld [vmem:[%s55] sm:$0xff]
    %s57 = scalar_lea.vmem [#allocation2], 16
    %v58 = vld [vmem:[%s57] sm:$0xff]
    %s59 = scalar_lea.vmem [#allocation2], 24
    %v60 = vld [vmem:[%s59] sm:$0xff]
    %v61 = vld [vmem:[#allocation5] sm:$0xff]
    %s62 = scalar_lea.vmem [#allocation5], 8
    %v63 = vld [vmem:[%s62] sm:$0xff]
    %s64 = scalar_lea.vmem [#allocation5], 16
    %v65 = vld [vmem:[%s64] sm:$0xff]
    %s66 = scalar_lea.vmem [#allocation5], 24
    %v67 = vld [vmem:[%s66] sm:$0xff]
    %v68 = vadd.f32 %v61, %v65
    %v69 = vadd.f32 %v63, %v67
    %v70 = vmul.f32 %v68, %v69
    %v71 = vadd.f32 %v54, %v58
    %v72 = vadd.f32 %v56, %v60
    %v73 = vmul.f32 %v71, %v72
    %v74 = vmin.f32 %v54, %v61
    %v75 = vmin.f32 %v58, %v65
    %v76 = vadd.f32 %v74, %v75
    %v77 = vmin.f32 %v60, %v67
    %v78 = vmin.f32 %v56, %v63
    %v79 = vadd.f32 %v77, %v78
    %v80 = vmul.f32 %v76, %v79
    %v81 = vadd.f32 %v70, %v73
    %v82 = vsub.f32 %v81, %v80
    %v83 = vadd.f32 %v80, 1.0
    %v84 = vadd.f32 %v82, 1.0
    %v85 = vrcp.pop %v84
    %v86 = vmul.f32 %v83, %v85
    %v87 = vsub.f32 1.0, %v86
    %v88 = vld [vmem:[#allocation7] sm:$0xff]
    %v89 = vmul.f32 %v87, %v88
    %v90 = vadd.f32 %v89, 0.0
    %91 = vst [vmem:[#allocation8] sm:$0xff] %v90
    %v92 = vadd.f32 %v88, 0.0
    %s93 = scalar_lea.vmem [#allocation8], 8
    %94 = vst [vmem:[%s93] sm:$0xff] %v92
    %v95 = vadd.f32 %v87, 0.0
    %s96 = scalar_lea.vmem [#allocation8], 16
    %97 = vst [vmem:[%s96] sm:$0xff] %v95
    // Predicated region
    $region26: #{tpu_custom_call.1} parent=1 // pred_check
      _
    $region27: #{tpu_custom_call.1} parent=1 // pred_check_branch
      %99 = sbr.rel (0) target = $region29
    $region28: #{tpu_custom_call.1} parent=1 // pred_region
      %s101 = ssub.s32 384, 384
      %102 = vsyncadd [#allocation4], %s101
      %s103 = sshll.u32 [#allocation8], 4
      %s104 = int_to_ptr.vmem [resolvable:$true] %s103
      %109 = dma.vmem_to_hbm [thread:$0]  %s104, 384, %s3, [#allocation4], 128, 128, 8
    $region29: #{tpu_custom_call.1} parent=1 // pred_fallthru
      _
    // Predicated region
    $region30: #{tpu_custom_call.1} parent=1 // pred_check
      _
    $region31: #{tpu_custom_call.1} parent=1 // pred_check_branch
      %111 = sbr.rel (0) target = $region33
    $region32: #{tpu_custom_call.1} parent=1 // pred_region
      %112 = dma.done [#allocation4], 384
    $region33: #{tpu_custom_call.1} parent=1 // pred_fallthru
      _
    %113 = vsyncpa [#allocation3], 1
    %114 = vsyncpa [#allocation6], 1
    %115 = vsyncpa [#allocation4], 1

</llo_original>
